<compile_context>
chip_gen: v7x
topology: tpu7x:2x2x1
jax: 0.10.0
libtpu: 0.0.40
codegen_flags: <defaults>
</compile_context>

<pallas_src>
import functools

import jax
import jax.numpy as jnp
from jax.experimental import pallas as pl
from jax.experimental.pallas import tpu as pltpu


def _choose_block_rows(total_rows, feats_dim, itemsize,
                       vmem_block_bytes=4 * 1024 * 1024):
    """Largest row tile (dtype-native sublane multiple) under the byte cap."""
    sub = max(8, 32 // max(1, itemsize))          # 8 f32 / 16 bf16 / 32 int8
    row_bytes = max(1, feats_dim * itemsize)
    rows = (vmem_block_bytes // row_bytes) // sub * sub
    rows = max(sub, rows)
    if rows >= total_rows:
        return total_rows                          # whole array in one block
    return rows                                    # ragged last block is fine


def make_adaptive_cms(batch, chunk_len, feats_dim, dtype=jnp.float32,
                      block_rows=None):
    """Returns a callable (norm_w, x) -> out implemented as a Pallas TPU kernel.

    x: (batch, chunk_len, feats_dim) in `dtype` (f32 or bf16).
    norm_w: (chunk_len,) f32 parameter.
    """
    itemsize = jnp.dtype(dtype).itemsize
    total_rows = batch * chunk_len
    sub = max(8, 32 // max(1, itemsize))

    if block_rows is None:
        block_rows = _choose_block_rows(total_rows, feats_dim, itemsize)
    block_rows = min(block_rows, total_rows)
    if block_rows < total_rows:
        block_rows = max(sub, (block_rows // sub) * sub)  # (8,128)-rule, dtype-aware
    n_r = pl.cdiv(total_rows, block_rows)

    def cms_kernel(w_ref, x_ref, o_ref):
        # x_ref: (block_rows, F) tile; w_ref: (block_rows, 1) f32 with the
        # 1/chunk_len scale folded in (rows on sublanes for both).
        x = x_ref[...]                                           # native dtype
        s = jnp.sum(x.astype(jnp.float32), axis=-1, keepdims=True)  # f32 reduce
        corr = w_ref[...] * s                                    # (rows, 1) f32
        # Native-dtype subtract (lane broadcast of corr across F).
        o_ref[...] = x - corr.astype(x.dtype)

    grid_spec = pltpu.PrefetchScalarGridSpec(
        num_scalar_prefetch=0,
        grid=(n_r,),
        in_specs=[
            # norm_w rows, tracking the row tile; rows on sublanes.
            pl.BlockSpec((block_rows, 1), lambda r: (r, 0)),
            # one row tile of the flattened x per grid step.
            pl.BlockSpec((block_rows, feats_dim), lambda r: (r, 0)),
        ],
        out_specs=pl.BlockSpec((block_rows, feats_dim), lambda r: (r, 0)),
    )

    call = pl.pallas_call(
        cms_kernel,
        out_shape=jax.ShapeDtypeStruct((total_rows, feats_dim), dtype),
        grid_spec=grid_spec,
        compiler_params=pltpu.CompilerParams(
            # Independent row tiles; explicit VMEM limit keeps the 4 MiB tile
            # cap portable across v5e/v6e/v7x scoped-VMEM defaults.
            dimension_semantics=("parallel",),
            vmem_limit_bytes=32 * 1024 * 1024,
        ),
    )

    def adaptive_cms(norm_w, x):
        assert x.shape == (batch, chunk_len, feats_dim)
        assert norm_w.shape == (chunk_len,)
        x = x.astype(dtype)
        # Fold 1/chunk_len into the tiny parameter and replicate it across the
        # batch so it lines up with the flattened (B*T,) row axis.
        w = (norm_w.astype(jnp.float32) / chunk_len)
        w_rows = jnp.tile(w, batch).reshape(total_rows, 1)
        x_rows = x.reshape(total_rows, feats_dim)       # free reshape (contiguous)
        out = call(w_rows, x_rows)
        return out.reshape(batch, chunk_len, feats_dim)

    return adaptive_cms


def adaptive_cms_ref(norm_w, x, chunk_len):
    """Pure-JAX reference mirroring the PyTorch forward (computed in f32)."""
    xf = x.astype(jnp.float32)
    mean_x = jnp.einsum('j,ijk->ijk', norm_w.astype(jnp.float32), xf)
    sum_mean_x = jnp.sum(mean_x, axis=2) / chunk_len
    return (xf - sum_mean_x[:, :, None]).astype(x.dtype)


if __name__ == "__main__":
    key = jax.random.PRNGKey(0)
    k0, k1, k2 = jax.random.split(key, 3)

    # ---- float32 path (F multiple of 128 -> lane-dense stores) ----
    batch, chunk_len, feats_dim = 2, 16, 128
    x = jax.random.normal(k0, (batch, chunk_len, feats_dim), dtype=jnp.float32)
    norm_w = jnp.ones((chunk_len,), dtype=jnp.float32)   # matches torch.ones init

    cms_f32 = make_adaptive_cms(batch, chunk_len, feats_dim, dtype=jnp.float32)
    out = jax.block_until_ready(cms_f32(norm_w, x))
    ref = adaptive_cms_ref(norm_w, x, chunk_len)
    assert out.shape == (batch, chunk_len, feats_dim)
    assert jnp.allclose(out, ref, atol=1e-5, rtol=1e-5)

    # ---- bfloat16 path (halves HBM traffic; native-dtype subtract in-kernel) ----
    x_bf16 = x.astype(jnp.bfloat16)
    cms_bf16 = make_adaptive_cms(batch, chunk_len, feats_dim, dtype=jnp.bfloat16)
    out_bf16 = jax.block_until_ready(cms_bf16(norm_w, x_bf16))
    ref_bf16 = adaptive_cms_ref(norm_w, x_bf16, chunk_len)
    assert out_bf16.dtype == jnp.bfloat16
    assert jnp.allclose(out_bf16.astype(jnp.float32),
                        ref_bf16.astype(jnp.float32), atol=5e-2, rtol=5e-2)

    # ---- ragged last row tile (B*T = 30 not divisible by forced block_rows=16) ----
    b2, t2, f2 = 3, 10, 128
    x2 = jax.random.normal(k1, (b2, t2, f2), dtype=jnp.float32)
    w2 = jax.random.normal(k2, (t2,), dtype=jnp.float32)
    cms_ragged = make_adaptive_cms(b2, t2, f2, dtype=jnp.float32, block_rows=16)
    out2 = jax.block_until_ready(cms_ragged(w2, x2))
    ref2 = adaptive_cms_ref(w2, x2, t2)
    assert jnp.allclose(out2, ref2, atol=1e-5, rtol=1e-5)

    print("KERNEL_OK")
</pallas_src>

<mosaic_0001>
module attributes {stable_mosaic.version = 11 : i64} {
  func.func @cms_kernel(%arg0: i32, %arg1: memref<32x1xf32, #tpu.memory_space<vmem>>, %arg2: memref<32x128xf32, #tpu.memory_space<vmem>>, %arg3: memref<32x128xf32, #tpu.memory_space<vmem>>) attributes {dimension_semantics = [#tpu.dimension_semantics<parallel>], iteration_bounds = array<i64: 1>, scalar_prefetch = 0 : i64, scratch_operands = 0 : i64, tpu.core_type = #tpu.core_type<tc>, window_params = [{transform_indices = @transform_0, window_bounds = array<i64: 32, 1>}, {transform_indices = @transform_1, window_bounds = array<i64: 32, 128>}, {transform_indices = @transform_2, window_bounds = array<i64: 32, 128>}]} {
    %c0 = arith.constant 0 : index
    %c0_0 = arith.constant 0 : index
    %0 = vector.load %arg2[%c0, %c0_0] : memref<32x128xf32, #tpu.memory_space<vmem>>, vector<32x128xf32>
    %cst = arith.constant dense<0.000000e+00> : vector<32xf32>
    %1 = vector.multi_reduction <add>, %0, %cst [1] : vector<32x128xf32> to vector<32xf32>
    %2 = vector.shape_cast %1 : vector<32xf32> to vector<32x1xf32>
    %c0_1 = arith.constant 0 : index
    %c0_2 = arith.constant 0 : index
    %3 = vector.load %arg1[%c0_1, %c0_2] : memref<32x1xf32, #tpu.memory_space<vmem>>, vector<32x1xf32>
    %4 = arith.mulf %3, %2 : vector<32x1xf32>
    %5 = vector.broadcast %4 : vector<32x1xf32> to vector<32x128xf32>
    %6 = arith.subf %0, %5 : vector<32x128xf32>
    %c0_3 = arith.constant 0 : index
    %c0_4 = arith.constant 0 : index
    %7 = vector.load %arg3[%c0_3, %c0_4] : memref<32x128xf32, #tpu.memory_space<vmem>>, vector<32x128xf32>
    tpu.vector_store %arg3[%c0_3, %c0_4], %6 {strides = array<i32>} : memref<32x128xf32, #tpu.memory_space<vmem>>, vector<32x128xf32>,
    return
  }
  func.func @transform_0(%arg0: i32) -> (i32, i32) {
    %c0_i32 = arith.constant 0 : i32
    %c0_i32_0 = arith.constant 0 : i32
    return %arg0, %c0_i32 : i32, i32
  }
  func.func @transform_1(%arg0: i32) -> (i32, i32) {
    %c0_i32 = arith.constant 0 : i32
    %c0_i32_0 = arith.constant 0 : i32
    return %arg0, %c0_i32 : i32, i32
  }
  func.func @transform_2(%arg0: i32) -> (i32, i32) {
    %c0_i32 = arith.constant 0 : i32
    %c0_i32_0 = arith.constant 0 : i32
    return %arg0, %c0_i32 : i32, i32
  }
}

</mosaic_0001>

<llo_original>
// kernel: tpu_custom_call.1
$region0: #{tpu_custom_call.1}
  #allocation0 [shape = 'u32[]', space=smem, size = 0x4, offset = 0x4, fixed_abs, tag = 'smem constant byte address 0x4 - core index']
  #allocation1 [shape = 'u32[144,128]{1,0:T(1,128)}', space=vmem, size = 0x12000, scoped, tag = 'internal scratch']
  %s0 = inlined_call_operand.vmem [shape: f32[32,1], index: 0, kind: input, shape index: {}]
  %s1 = inlined_call_operand.vmem [shape: f32[32,128], index: 1, kind: input, shape index: {}]
  %s2 = inlined_call_operand.hbm [shape: f32[32,128], index: 2, kind: output, shape index: {}]
  %s3 = sld [smem:[#allocation0]]
  $region18: #{tpu_custom_call.1} parent=0
    _
  %s5 = ssub.s32 1, %s3
  %s6 = scalar_select 0, %s5, %s3
  $region1: #{tpu_custom_call.1} parent=0
    #allocation2 [shape = 'u8[16384]{0}', space=vmem, size = 0x4000, scoped, tag = 'output window, operand 0, single buffered']
    #allocation3 [shape = 's32[1]{0}', space=sflag, size = 0x4, scoped, tag = 'scoped memory for tpu_custom_call.1']
    %7 = vsyncpa [#allocation3], 0
    // Predicated region
    $region2: #{tpu_custom_call.1} parent=1 // pred_check
      _
    $region3: #{tpu_custom_call.1} parent=1 // pred_check_branch
      %9 = sbr.rel (0) target = $region5
    $region4: #{tpu_custom_call.1} parent=1 // pred_region
      _
    $region5: #{tpu_custom_call.1} parent=1 // pred_fallthru
      _
    // Predicated region
    $region6: #{tpu_custom_call.1} parent=1 // pred_check
      _
    $region7: #{tpu_custom_call.1} parent=1 // pred_check_branch
      %11 = sbr.rel (0) target = $region9
    $region8: #{tpu_custom_call.1} parent=1 // pred_region
      _
    $region9: #{tpu_custom_call.1} parent=1 // pred_fallthru
      _
    %v12 = vld [vmem:[%s1] sm:$0xff]
    %v13 = vld [vmem:[%s1 + $0x8] sm:$0xff]
    %v14 = vld [vmem:[%s1 + $0x10] sm:$0xff]
    %v15 = vld [vmem:[%s1 + $0x18] sm:$0xff]
    %16 = vadd.xlane.f32.xlu0 %v12
    %v17 = vpop.xlane.xlu0 %16
    %18 = vadd.xlane.f32.xlu0 %v13
    %v19 = vpop.xlane.xlu0 %18
    %20 = vadd.xlane.f32.xlu0 %v14
    %v21 = vpop.xlane.xlu0 %20
    %22 = vadd.xlane.f32.xlu0 %v15
    %v23 = vpop.xlane.xlu0 %22
    %v24 = vld [vmem:[%s0] sm:$0xff]
    %v25 = vld [vmem:[%s0 + $0x8] sm:$0xff]
    %v26 = vld [vmem:[%s0 + $0x10] sm:$0xff]
    %v27 = vld [vmem:[%s0 + $0x18] sm:$0xff]
    %v28 = vmul.f32 %v24, %v17
    %v29 = vmul.f32 %v25, %v19
    %v30 = vmul.f32 %v26, %v21
    %v31 = vmul.f32 %v27, %v23
    %33 = vset.pattern.permute.xlu0 0
    %34 = vperm.xlu0 %33, %v28
    %v35 = vpop.permute.xlu0 %34
    %38 = vset.pattern.permute.xlu0 0
    %39 = vperm.xlu0 %38, %v29
    %v40 = vpop.permute.xlu0 %39
    %43 = vset.pattern.permute.xlu0 0
    %44 = vperm.xlu0 %43, %v30
    %v45 = vpop.permute.xlu0 %44
    %48 = vset.pattern.permute.xlu0 0
    %49 = vperm.xlu0 %48, %v31
    %v50 = vpop.permute.xlu0 %49
    %v52 = vsub.f32 %v12, %v35
    %v53 = vsub.f32 %v13, %v40
    %v54 = vsub.f32 %v14, %v45
    %v55 = vsub.f32 %v15, %v50
    %56 = vst [vmem:[#allocation2] sm:$0xff] %v52
    %57 = vst [vmem:[#allocation2 + $0x8] sm:$0xff] %v53
    %58 = vst [vmem:[#allocation2 + $0x10] sm:$0xff] %v54
    %59 = vst [vmem:[#allocation2 + $0x18] sm:$0xff] %v55
    // Predicated region
    $region10: #{tpu_custom_call.1} parent=1 // pred_check
      _
    $region11: #{tpu_custom_call.1} parent=1 // pred_check_branch
      %61 = sbr.rel (0) target = $region13
    $region12: #{tpu_custom_call.1} parent=1 // pred_region
      %s63 = ssub.s32 512, 512
      %64 = vsyncadd [#allocation3], %s63
      %s65 = sshll.u32 [#allocation2], 4
      %s66 = int_to_ptr.vmem [resolvable:$true] %s65
      %71 = dma.vmem_to_hbm [thread:$0]  %s66, 512, %s2, [#allocation3], 128, 128, 8
    $region13: #{tpu_custom_call.1} parent=1 // pred_fallthru
      _
    // Predicated region
    $region14: #{tpu_custom_call.1} parent=1 // pred_check
      _
    $region15: #{tpu_custom_call.1} parent=1 // pred_check_branch
      %73 = sbr.rel (0) target = $region17
    $region16: #{tpu_custom_call.1} parent=1 // pred_region
      %74 = dma.done [#allocation3], 512
    $region17: #{tpu_custom_call.1} parent=1 // pred_fallthru
      _
    %75 = vsyncpa [#allocation3], 1

</llo_original>
